<compile_context>
chip_gen: v5e
topology: v5e:2x2
jax: 0.10.0
libtpu: 0.0.40
codegen_flags: <defaults>
</compile_context>

<pallas_src>
import functools

import jax
import jax.numpy as jnp
from jax import lax
from jax.experimental import pallas as pl
from jax.experimental.pallas import tpu as pltpu

EPS = 1e-5


def _residual_block_kernel(x_ref, w1_ref, g1_ref, be1_ref,
                           w2_ref, g2_ref, be2_ref, o_ref, *, n_images, width):
    NC, HW = x_ref.shape
    N = n_images
    C = NC // N
    W = width
    PAD = W + 1                                   # covers |dh*W + dw| <= W+1

    # w-edge validity masks on the flat (h*W + w) axis, hoisted ONCE to full
    # (NC, HW) shape (JAX does not CSE broadcast_in_dim) and reused by both
    # convs. The h-edges need no mask: the lane zero-padding supplies zeros.
    w_pos = lax.broadcasted_iota(jnp.int32, (NC, HW), 1) % W
    mask_l = w_pos >= 1                           # source column (w-1) in range
    mask_r = w_pos < (W - 1)                      # source column (w+1) in range
    zpad = jnp.zeros((NC, PAD), jnp.float32)

    taps_meta = [((kh - 1) * W + (kw - 1), kw - 1)
                 for kh in range(3) for kw in range(3)]

    def conv(a, w_ref):
        # 3x3 conv over the whole batch as ONE matmul with block-diagonal
        # (over images) weights: (N*C, 9*N*C) @ (9*N*C, HW) -> (N*C, HW).
        # Taps stay in vregs: lane zero-pad + misaligned lane slices (XLU) +
        # edge selects (VPU) -- no VMEM round-trip.
        padded = jnp.concatenate([zpad, a, zpad], axis=1)     # (NC, HW + 2*PAD)
        taps = []
        for off, dw in taps_meta:
            tap = padded[:, PAD + off:PAD + off + HW]         # (NC, HW)
            if dw == -1:
                tap = jnp.where(mask_l, tap, 0.0)
            elif dw == 1:
                tap = jnp.where(mask_r, tap, 0.0)
            taps.append(tap)
        patches = jnp.concatenate(taps, axis=0)               # (9*NC, HW) sublane stack
        return jnp.dot(w_ref[...], patches,
                       preferred_element_type=jnp.float32)    # (NC, HW) f32

    def bn_affine(y, g_ref, be_ref):
        # Batch-statistics BN folded into a per-channel affine, computed in a
        # single pass: sum & sum-of-squares, var = E[y^2] - mean^2.
        inv_cnt = 1.0 / (N * HW)
        s_lane = jnp.sum(y, axis=1, keepdims=True)            # (NC, 1)
        q_lane = jnp.sum(y * y, axis=1, keepdims=True)        # (NC, 1)
        s_c = s_lane[0:C]
        q_c = q_lane[0:C]
        for n in range(1, N):                                 # fold the N image blocks
            s_c = s_c + s_lane[n * C:(n + 1) * C]
            q_c = q_c + q_lane[n * C:(n + 1) * C]
        mean = s_c * inv_cnt
        var = q_c * inv_cnt - mean * mean
        scale = g_ref[...] * lax.rsqrt(var + EPS)             # (C, 1)
        shift = be_ref[...] - mean * scale                    # (C, 1)
        # replicate the per-channel affine across the N image sublane blocks
        scale_nc = jnp.concatenate([scale] * N, axis=0)       # (NC, 1)
        shift_nc = jnp.concatenate([shift] * N, axis=0)
        return scale_nc, shift_nc

    # ---- conv1 -> bn1 -> relu (ReLU fused into the folded-BN epilogue) ----
    y = conv(x_ref[...].astype(jnp.float32), w1_ref)
    s1, t1 = bn_affine(y, g1_ref, be1_ref)
    h = jnp.maximum(y * s1 + t1, 0.0)

    # ---- conv2 -> bn2 -> residual add (conv biases cancel under batch-stat BN)
    z = conv(h, w2_ref)
    s2, t2 = bn_affine(z, g2_ref, be2_ref)
    # x is re-read from VMEM here (cheap vld) instead of held live across both convs.
    o_ref[...] = (z * s2 + t2 + x_ref[...].astype(jnp.float32)).astype(o_ref.dtype)


def residual_block(x_nchw, params):
    """x_nchw: (N, C, H, W) float32. params: PyTorch-convention parameter tuple."""
    w1, b1, g1, be1, w2, b2, g2, be2 = params
    del b1, b2  # conv biases cancel exactly under batch-statistics BatchNorm
    N, C, H, W = x_nchw.shape
    HW = H * W
    NC = N * C

    # Free reshape only: (N, C, H, W) -> (N*C, H*W). No activation transposes.
    x_flat = x_nchw.reshape(NC, HW)

    def repack(w):
        # One-time weight repack (hoist out of the per-call path in a real net):
        # OIHW -> block-diagonal-over-images (N*C_out, 9*N*C_in), tap-major /
        # image-block / channel-minor, matching the in-kernel tap stack order.
        c_out, c_in = w.shape[0], w.shape[1]
        w_t = jnp.transpose(w, (2, 3, 0, 1)).reshape(9, c_out, c_in).astype(jnp.float32)
        eye = jnp.eye(N, dtype=jnp.float32)
        wb = jnp.einsum('nm,toc->notmc', eye, w_t)     # (N, C_out, 9, N, C_in)
        return wb.reshape(N * c_out, 9 * N * c_in)

    col = lambda v: v.reshape(-1, 1).astype(jnp.float32)

    out_flat = pl.pallas_call(
        functools.partial(_residual_block_kernel, n_images=N, width=W),
        out_shape=jax.ShapeDtypeStruct((NC, HW), x_nchw.dtype),
        in_specs=[pl.BlockSpec(memory_space=pltpu.MemorySpace.VMEM)] * 7,
        out_specs=pl.BlockSpec(memory_space=pltpu.MemorySpace.VMEM),
    )(x_flat, repack(w1), col(g1), col(be1), repack(w2), col(g2), col(be2))

    return out_flat.reshape(N, C, H, W)


# ---------------- pure-JAX reference (for verification) ----------------
def _reference(x_nchw, params):
    w1, b1, g1, be1, w2, b2, g2, be2 = params

    def conv(x, w, b):  # x: NCHW, w: OIHW
        y = lax.conv_general_dilated(
            x, w, window_strides=(1, 1), padding=((1, 1), (1, 1)),
            dimension_numbers=('NCHW', 'OIHW', 'NCHW'))
        return y + b.reshape(1, -1, 1, 1)

    def bn(x, g, be):
        mean = jnp.mean(x, axis=(0, 2, 3), keepdims=True)
        var = jnp.mean((x - mean) ** 2, axis=(0, 2, 3), keepdims=True)
        return (x - mean) * lax.rsqrt(var + EPS) * g.reshape(1, -1, 1, 1) \
            + be.reshape(1, -1, 1, 1)

    y = jax.nn.relu(bn(conv(x_nchw, w1, b1), g1, be1))
    y = bn(conv(y, w2, b2), g2, be2)
    return y + x_nchw


if __name__ == "__main__":
    N, C, H, W = 2, 4, 16, 16          # in_channels == out_channels == 4
    key = jax.random.PRNGKey(0)
    ks = jax.random.split(key, 9)

    x = jax.random.normal(ks[0], (N, C, H, W), jnp.float32)
    w1 = 0.1 * jax.random.normal(ks[1], (C, C, 3, 3), jnp.float32)   # OIHW
    b1 = 0.1 * jax.random.normal(ks[2], (C,), jnp.float32)
    w2 = 0.1 * jax.random.normal(ks[3], (C, C, 3, 3), jnp.float32)
    b2 = 0.1 * jax.random.normal(ks[4], (C,), jnp.float32)
    g1 = 1.0 + 0.1 * jax.random.normal(ks[5], (C,), jnp.float32)     # bn1 weight
    be1 = 0.1 * jax.random.normal(ks[6], (C,), jnp.float32)          # bn1 bias
    g2 = 1.0 + 0.1 * jax.random.normal(ks[7], (C,), jnp.float32)     # bn2 weight
    be2 = 0.1 * jax.random.normal(ks[8], (C,), jnp.float32)          # bn2 bias
    params = (w1, b1, g1, be1, w2, b2, g2, be2)

    out = jax.block_until_ready(residual_block(x, params))
    ref = jax.block_until_ready(_reference(x, params))

    assert out.shape == (N, C, H, W)
    assert jnp.allclose(out, ref, rtol=5e-4, atol=5e-4), \
        f"max abs err {jnp.max(jnp.abs(out - ref))}"
    print("KERNEL_OK")
</pallas_src>

<mosaic_0001>
module attributes {stable_mosaic.version = 11 : i64} {
  func.func @_residual_block_kernel(%arg0: memref<8x256xf32, #tpu.memory_space<vmem>>, %arg1: memref<8x72xf32, #tpu.memory_space<vmem>>, %arg2: memref<4x1xf32, #tpu.memory_space<vmem>>, %arg3: memref<4x1xf32, #tpu.memory_space<vmem>>, %arg4: memref<8x72xf32, #tpu.memory_space<vmem>>, %arg5: memref<4x1xf32, #tpu.memory_space<vmem>>, %arg6: memref<4x1xf32, #tpu.memory_space<vmem>>, %arg7: memref<8x256xf32, #tpu.memory_space<vmem>>) attributes {dimension_semantics = [], scalar_prefetch = 0 : i64, scratch_operands = 0 : i64, tpu.core_type = #tpu.core_type<tc>} {
    %0 = tpu.iota {dimensions = array<i32: 1>} : vector<8x256xi32>
    %c16_i32 = arith.constant 16 : i32
    %c0_i32 = arith.constant 0 : i32
    %1 = arith.cmpi eq, %c16_i32, %c0_i32 : i32
    %c1_i32 = arith.constant 1 : i32
    %2 = arith.select %1, %c1_i32, %c16_i32 : i32
    %3 = vector.broadcast %2 : i32 to vector<8x256xi32>
    %4 = arith.remsi %0, %3 : vector<8x256xi32>
    %c0_i32_0 = arith.constant 0 : i32
    %5 = vector.broadcast %c0_i32_0 : i32 to vector<8x256xi32>
    %6 = arith.cmpi ne, %4, %5 : vector<8x256xi32>
    %c0_i32_1 = arith.constant 0 : i32
    %7 = vector.broadcast %c0_i32_1 : i32 to vector<8x256xi32>
    %8 = arith.cmpi slt, %4, %7 : vector<8x256xi32>
    %c0_i32_2 = arith.constant 0 : i32
    %9 = arith.cmpi slt, %2, %c0_i32_2 : i32
    %10 = vector.broadcast %9 : i1 to vector<8x256xi1>
    %11 = vector.broadcast %10 : vector<8x256xi1> to vector<8x256xi1>
    %12 = arith.xori %8, %11 : vector<8x256xi1>
    %13 = arith.andi %12, %6 : vector<8x256xi1>
    %14 = vector.broadcast %2 : i32 to vector<8x256xi32>
    %15 = arith.addi %4, %14 : vector<8x256xi32>
    %16 = arith.select %13, %15, %4 : vector<8x256xi1>, vector<8x256xi32>
    %c1_i32_3 = arith.constant 1 : i32
    %17 = vector.broadcast %c1_i32_3 : i32 to vector<8x256xi32>
    %18 = arith.cmpi sge, %16, %17 : vector<8x256xi32>
    %c15_i32 = arith.constant 15 : i32
    %19 = vector.broadcast %c15_i32 : i32 to vector<8x256xi32>
    %20 = arith.cmpi slt, %16, %19 : vector<8x256xi32>
    %cst = arith.constant 0.000000e+00 : f32
    %21 = vector.broadcast %cst : f32 to vector<8x17xf32>
    %c0 = arith.constant 0 : index
    %c0_4 = arith.constant 0 : index
    %22 = vector.load %arg0[%c0, %c0_4] : memref<8x256xf32, #tpu.memory_space<vmem>>, vector<8x256xf32>
    %23 = tpu.concatenate %21, %22, %21 in 1 : vector<8x17xf32>, vector<8x256xf32>, vector<8x17xf32> -> vector<8x290xf32>
    %24 = vector.extract_strided_slice %23 {offsets = [0, 0], sizes = [8, 256], strides = [1, 1]} : vector<8x290xf32> to vector<8x256xf32>
    %cst_5 = arith.constant 0.000000e+00 : f32
    %25 = vector.broadcast %cst_5 : f32 to vector<8x256xf32>
    %26 = arith.select %18, %24, %25 : vector<8x256xi1>, vector<8x256xf32>
    %27 = vector.extract_strided_slice %23 {offsets = [0, 1], sizes = [8, 256], strides = [1, 1]} : vector<8x290xf32> to vector<8x256xf32>
    %28 = vector.extract_strided_slice %23 {offsets = [0, 2], sizes = [8, 256], strides = [1, 1]} : vector<8x290xf32> to vector<8x256xf32>
    %cst_6 = arith.constant 0.000000e+00 : f32
    %29 = vector.broadcast %cst_6 : f32 to vector<8x256xf32>
    %30 = arith.select %20, %28, %29 : vector<8x256xi1>, vector<8x256xf32>
    %31 = vector.extract_strided_slice %23 {offsets = [0, 16], sizes = [8, 256], strides = [1, 1]} : vector<8x290xf32> to vector<8x256xf32>
    %cst_7 = arith.constant 0.000000e+00 : f32
    %32 = vector.broadcast %cst_7 : f32 to vector<8x256xf32>
    %33 = arith.select %18, %31, %32 : vector<8x256xi1>, vector<8x256xf32>
    %34 = vector.extract_strided_slice %23 {offsets = [0, 17], sizes = [8, 256], strides = [1, 1]} : vector<8x290xf32> to vector<8x256xf32>
    %35 = vector.extract_strided_slice %23 {offsets = [0, 18], sizes = [8, 256], strides = [1, 1]} : vector<8x290xf32> to vector<8x256xf32>
    %cst_8 = arith.constant 0.000000e+00 : f32
    %36 = vector.broadcast %cst_8 : f32 to vector<8x256xf32>
    %37 = arith.select %20, %35, %36 : vector<8x256xi1>, vector<8x256xf32>
    %38 = vector.extract_strided_slice %23 {offsets = [0, 32], sizes = [8, 256], strides = [1, 1]} : vector<8x290xf32> to vector<8x256xf32>
    %cst_9 = arith.constant 0.000000e+00 : f32
    %39 = vector.broadcast %cst_9 : f32 to vector<8x256xf32>
    %40 = arith.select %18, %38, %39 : vector<8x256xi1>, vector<8x256xf32>
    %41 = vector.extract_strided_slice %23 {offsets = [0, 33], sizes = [8, 256], strides = [1, 1]} : vector<8x290xf32> to vector<8x256xf32>
    %42 = vector.extract_strided_slice %23 {offsets = [0, 34], sizes = [8, 256], strides = [1, 1]} : vector<8x290xf32> to vector<8x256xf32>
    %cst_10 = arith.constant 0.000000e+00 : f32
    %43 = vector.broadcast %cst_10 : f32 to vector<8x256xf32>
    %44 = arith.select %20, %42, %43 : vector<8x256xi1>, vector<8x256xf32>
    %45 = tpu.concatenate %26, %27, %30, %33, %34, %37, %40, %41, %44 in 0 : vector<8x256xf32>, vector<8x256xf32>, vector<8x256xf32>, vector<8x256xf32>, vector<8x256xf32>, vector<8x256xf32>, vector<8x256xf32>, vector<8x256xf32>, vector<8x256xf32> -> vector<72x256xf32>
    %c0_11 = arith.constant 0 : index
    %c0_12 = arith.constant 0 : index
    %46 = vector.load %arg1[%c0_11, %c0_12] : memref<8x72xf32, #tpu.memory_space<vmem>>, vector<8x72xf32>
    %cst_13 = arith.constant dense<0.000000e+00> : vector<8x256xf32>
    %47 = tpu.matmul %46, %45, %cst_13 {dimension_numbers = #tpu.dot_dimension_numbers<[1], [0], [0], [1], [0, 0, 1, 1], [], []>} : vector<8x72xf32>, vector<72x256xf32>, vector<8x256xf32> -> vector<8x256xf32>
    %cst_14 = arith.constant dense<0.000000e+00> : vector<8xf32>
    %48 = vector.multi_reduction <add>, %47, %cst_14 [1] : vector<8x256xf32> to vector<8xf32>
    %49 = vector.shape_cast %48 : vector<8xf32> to vector<8x1xf32>
    %50 = arith.mulf %47, %47 : vector<8x256xf32>
    %cst_15 = arith.constant dense<0.000000e+00> : vector<8xf32>
    %51 = vector.multi_reduction <add>, %50, %cst_15 [1] : vector<8x256xf32> to vector<8xf32>
    %52 = vector.shape_cast %51 : vector<8xf32> to vector<8x1xf32>
    %53 = vector.extract_strided_slice %49 {offsets = [0, 0], sizes = [4, 1], strides = [1, 1]} : vector<8x1xf32> to vector<4x1xf32>
    %54 = vector.extract_strided_slice %52 {offsets = [0, 0], sizes = [4, 1], strides = [1, 1]} : vector<8x1xf32> to vector<4x1xf32>
    %55 = vector.extract_strided_slice %49 {offsets = [4, 0], sizes = [4, 1], strides = [1, 1]} : vector<8x1xf32> to vector<4x1xf32>
    %56 = arith.addf %53, %55 : vector<4x1xf32>
    %57 = vector.extract_strided_slice %52 {offsets = [4, 0], sizes = [4, 1], strides = [1, 1]} : vector<8x1xf32> to vector<4x1xf32>
    %58 = arith.addf %54, %57 : vector<4x1xf32>
    %cst_16 = arith.constant 0.001953125 : f32
    %59 = vector.broadcast %cst_16 : f32 to vector<4x1xf32>
    %60 = arith.mulf %56, %59 : vector<4x1xf32>
    %cst_17 = arith.constant 0.001953125 : f32
    %61 = vector.broadcast %cst_17 : f32 to vector<4x1xf32>
    %62 = arith.mulf %58, %61 : vector<4x1xf32>
    %63 = arith.mulf %60, %60 : vector<4x1xf32>
    %64 = arith.subf %62, %63 : vector<4x1xf32>
    %c0_18 = arith.constant 0 : index
    %c0_19 = arith.constant 0 : index
    %65 = vector.load %arg2[%c0_18, %c0_19] : memref<4x1xf32, #tpu.memory_space<vmem>>, vector<4x1xf32>
    %cst_20 = arith.constant 9.99999974E-6 : f32
    %66 = vector.broadcast %cst_20 : f32 to vector<4x1xf32>
    %67 = arith.addf %64, %66 : vector<4x1xf32>
    %68 = math.rsqrt %67 : vector<4x1xf32>
    %69 = arith.mulf %65, %68 : vector<4x1xf32>
    %c0_21 = arith.constant 0 : index
    %c0_22 = arith.constant 0 : index
    %70 = vector.load %arg3[%c0_21, %c0_22] : memref<4x1xf32, #tpu.memory_space<vmem>>, vector<4x1xf32>
    %71 = arith.mulf %60, %69 : vector<4x1xf32>
    %72 = arith.subf %70, %71 : vector<4x1xf32>
    %73 = tpu.concatenate %69, %69 in 0 : vector<4x1xf32>, vector<4x1xf32> -> vector<8x1xf32>
    %74 = tpu.concatenate %72, %72 in 0 : vector<4x1xf32>, vector<4x1xf32> -> vector<8x1xf32>
    %75 = vector.broadcast %73 : vector<8x1xf32> to vector<8x256xf32>
    %76 = arith.mulf %47, %75 : vector<8x256xf32>
    %77 = vector.broadcast %74 : vector<8x1xf32> to vector<8x256xf32>
    %78 = arith.addf %76, %77 : vector<8x256xf32>
    %cst_23 = arith.constant 0.000000e+00 : f32
    %79 = vector.broadcast %cst_23 : f32 to vector<8x256xf32>
    %80 = arith.maximumf %78, %79 : vector<8x256xf32>
    %81 = tpu.concatenate %21, %80, %21 in 1 : vector<8x17xf32>, vector<8x256xf32>, vector<8x17xf32> -> vector<8x290xf32>
    %82 = vector.extract_strided_slice %81 {offsets = [0, 0], sizes = [8, 256], strides = [1, 1]} : vector<8x290xf32> to vector<8x256xf32>
    %cst_24 = arith.constant 0.000000e+00 : f32
    %83 = vector.broadcast %cst_24 : f32 to vector<8x256xf32>
    %84 = arith.select %18, %82, %83 : vector<8x256xi1>, vector<8x256xf32>
    %85 = vector.extract_strided_slice %81 {offsets = [0, 1], sizes = [8, 256], strides = [1, 1]} : vector<8x290xf32> to vector<8x256xf32>
    %86 = vector.extract_strided_slice %81 {offsets = [0, 2], sizes = [8, 256], strides = [1, 1]} : vector<8x290xf32> to vector<8x256xf32>
    %cst_25 = arith.constant 0.000000e+00 : f32
    %87 = vector.broadcast %cst_25 : f32 to vector<8x256xf32>
    %88 = arith.select %20, %86, %87 : vector<8x256xi1>, vector<8x256xf32>
    %89 = vector.extract_strided_slice %81 {offsets = [0, 16], sizes = [8, 256], strides = [1, 1]} : vector<8x290xf32> to vector<8x256xf32>
    %cst_26 = arith.constant 0.000000e+00 : f32
    %90 = vector.broadcast %cst_26 : f32 to vector<8x256xf32>
    %91 = arith.select %18, %89, %90 : vector<8x256xi1>, vector<8x256xf32>
    %92 = vector.extract_strided_slice %81 {offsets = [0, 17], sizes = [8, 256], strides = [1, 1]} : vector<8x290xf32> to vector<8x256xf32>
    %93 = vector.extract_strided_slice %81 {offsets = [0, 18], sizes = [8, 256], strides = [1, 1]} : vector<8x290xf32> to vector<8x256xf32>
    %cst_27 = arith.constant 0.000000e+00 : f32
    %94 = vector.broadcast %cst_27 : f32 to vector<8x256xf32>
    %95 = arith.select %20, %93, %94 : vector<8x256xi1>, vector<8x256xf32>
    %96 = vector.extract_strided_slice %81 {offsets = [0, 32], sizes = [8, 256], strides = [1, 1]} : vector<8x290xf32> to vector<8x256xf32>
    %cst_28 = arith.constant 0.000000e+00 : f32
    %97 = vector.broadcast %cst_28 : f32 to vector<8x256xf32>
    %98 = arith.select %18, %96, %97 : vector<8x256xi1>, vector<8x256xf32>
    %99 = vector.extract_strided_slice %81 {offsets = [0, 33], sizes = [8, 256], strides = [1, 1]} : vector<8x290xf32> to vector<8x256xf32>
    %100 = vector.extract_strided_slice %81 {offsets = [0, 34], sizes = [8, 256], strides = [1, 1]} : vector<8x290xf32> to vector<8x256xf32>
    %cst_29 = arith.constant 0.000000e+00 : f32
    %101 = vector.broadcast %cst_29 : f32 to vector<8x256xf32>
    %102 = arith.select %20, %100, %101 : vector<8x256xi1>, vector<8x256xf32>
    %103 = tpu.concatenate %84, %85, %88, %91, %92, %95, %98, %99, %102 in 0 : vector<8x256xf32>, vector<8x256xf32>, vector<8x256xf32>, vector<8x256xf32>, vector<8x256xf32>, vector<8x256xf32>, vector<8x256xf32>, vector<8x256xf32>, vector<8x256xf32> -> vector<72x256xf32>
    %c0_30 = arith.constant 0 : index
    %c0_31 = arith.constant 0 : index
    %104 = vector.load %arg4[%c0_30, %c0_31] : memref<8x72xf32, #tpu.memory_space<vmem>>, vector<8x72xf32>
    %cst_32 = arith.constant dense<0.000000e+00> : vector<8x256xf32>
    %105 = tpu.matmul %104, %103, %cst_32 {dimension_numbers = #tpu.dot_dimension_numbers<[1], [0], [0], [1], [0, 0, 1, 1], [], []>} : vector<8x72xf32>, vector<72x256xf32>, vector<8x256xf32> -> vector<8x256xf32>
    %cst_33 = arith.constant dense<0.000000e+00> : vector<8xf32>
    %106 = vector.multi_reduction <add>, %105, %cst_33 [1] : vector<8x256xf32> to vector<8xf32>
    %107 = vector.shape_cast %106 : vector<8xf32> to vector<8x1xf32>
    %108 = arith.mulf %105, %105 : vector<8x256xf32>
    %cst_34 = arith.constant dense<0.000000e+00> : vector<8xf32>
    %109 = vector.multi_reduction <add>, %108, %cst_34 [1] : vector<8x256xf32> to vector<8xf32>
    %110 = vector.shape_cast %109 : vector<8xf32> to vector<8x1xf32>
    %111 = vector.extract_strided_slice %107 {offsets = [0, 0], sizes = [4, 1], strides = [1, 1]} : vector<8x1xf32> to vector<4x1xf32>
    %112 = vector.extract_strided_slice %110 {offsets = [0, 0], sizes = [4, 1], strides = [1, 1]} : vector<8x1xf32> to vector<4x1xf32>
    %113 = vector.extract_strided_slice %107 {offsets = [4, 0], sizes = [4, 1], strides = [1, 1]} : vector<8x1xf32> to vector<4x1xf32>
    %114 = arith.addf %111, %113 : vector<4x1xf32>
    %115 = vector.extract_strided_slice %110 {offsets = [4, 0], sizes = [4, 1], strides = [1, 1]} : vector<8x1xf32> to vector<4x1xf32>
    %116 = arith.addf %112, %115 : vector<4x1xf32>
    %cst_35 = arith.constant 0.001953125 : f32
    %117 = vector.broadcast %cst_35 : f32 to vector<4x1xf32>
    %118 = arith.mulf %114, %117 : vector<4x1xf32>
    %cst_36 = arith.constant 0.001953125 : f32
    %119 = vector.broadcast %cst_36 : f32 to vector<4x1xf32>
    %120 = arith.mulf %116, %119 : vector<4x1xf32>
    %121 = arith.mulf %118, %118 : vector<4x1xf32>
    %122 = arith.subf %120, %121 : vector<4x1xf32>
    %c0_37 = arith.constant 0 : index
    %c0_38 = arith.constant 0 : index
    %123 = vector.load %arg5[%c0_37, %c0_38] : memref<4x1xf32, #tpu.memory_space<vmem>>, vector<4x1xf32>
    %cst_39 = arith.constant 9.99999974E-6 : f32
    %124 = vector.broadcast %cst_39 : f32 to vector<4x1xf32>
    %125 = arith.addf %122, %124 : vector<4x1xf32>
    %126 = math.rsqrt %125 : vector<4x1xf32>
    %127 = arith.mulf %123, %126 : vector<4x1xf32>
    %c0_40 = arith.constant 0 : index
    %c0_41 = arith.constant 0 : index
    %128 = vector.load %arg6[%c0_40, %c0_41] : memref<4x1xf32, #tpu.memory_space<vmem>>, vector<4x1xf32>
    %129 = arith.mulf %118, %127 : vector<4x1xf32>
    %130 = arith.subf %128, %129 : vector<4x1xf32>
    %131 = tpu.concatenate %127, %127 in 0 : vector<4x1xf32>, vector<4x1xf32> -> vector<8x1xf32>
    %132 = tpu.concatenate %130, %130 in 0 : vector<4x1xf32>, vector<4x1xf32> -> vector<8x1xf32>
    %133 = vector.broadcast %131 : vector<8x1xf32> to vector<8x256xf32>
    %134 = arith.mulf %105, %133 : vector<8x256xf32>
    %135 = vector.broadcast %132 : vector<8x1xf32> to vector<8x256xf32>
    %136 = arith.addf %134, %135 : vector<8x256xf32>
    %c0_42 = arith.constant 0 : index
    %c0_43 = arith.constant 0 : index
    %137 = vector.load %arg0[%c0_42, %c0_43] : memref<8x256xf32, #tpu.memory_space<vmem>>, vector<8x256xf32>
    %138 = arith.addf %136, %137 : vector<8x256xf32>
    %c0_44 = arith.constant 0 : index
    %c0_45 = arith.constant 0 : index
    %139 = vector.load %arg7[%c0_44, %c0_45] : memref<8x256xf32, #tpu.memory_space<vmem>>, vector<8x256xf32>
    tpu.vector_store %arg7[%c0_44, %c0_45], %138 {strides = array<i32>} : memref<8x256xf32, #tpu.memory_space<vmem>>, vector<8x256xf32>,
    return
  }
}

</mosaic_0001>

<llo_original>
// kernel: tpu_custom_call.1
$region0: #{tpu_custom_call.1}
  #allocation0 [shape = 'u32[]', space=smem, size = 0x4, offset = 0x4, fixed_abs, tag = 'smem constant byte address 0x4 - core index']
  #allocation1 [shape = 'u32[72,128]{1,0:T(1,128)}', space=vmem, size = 0x9000, scoped, tag = 'internal scratch']
  %s0 = inlined_call_operand.hbm [shape: f32[8,256], index: 0, kind: input, shape index: {}]
  %s1 = inlined_call_operand.vmem [shape: f32[8,72], index: 1, kind: input, shape index: {}]
  %s2 = inlined_call_operand.vmem [shape: f32[4,1], index: 2, kind: input, shape index: {}]
  %s3 = inlined_call_operand.vmem [shape: f32[4,1], index: 3, kind: input, shape index: {}]
  %s4 = inlined_call_operand.hbm [shape: f32[8,72], index: 4, kind: input, shape index: {}]
  %s5 = inlined_call_operand.vmem [shape: f32[4,1], index: 5, kind: input, shape index: {}]
  %s6 = inlined_call_operand.vmem [shape: f32[4,1], index: 6, kind: input, shape index: {}]
  %s7 = inlined_call_operand.hbm [shape: f32[8,256], index: 7, kind: output, shape index: {}]
  %s8 = sld [smem:[#allocation0]]
  $region46: #{tpu_custom_call.1} parent=0
    _
  %s10 = ssub.s32 1, %s8
  %s11 = scalar_select 0, %s10, %s8
  $region1: #{tpu_custom_call.1} parent=0
    #allocation2 [shape = 'u8[8192]{0}', space=vmem, size = 0x2000, scoped, tag = 'input window, operand 0, single buffered']
    #allocation3 [shape = 's32[1]{0}', space=sflag, size = 0x4, scoped, tag = 'scoped memory for tpu_custom_call.1']
    #allocation4 [shape = 's32[1]{0}', space=sflag, size = 0x4, scoped, tag = 'scoped memory for tpu_custom_call.1']
    #allocation5 [shape = 'u8[4096]{0}', space=vmem, size = 0x1000, scoped, tag = 'input window, operand 4, single buffered']
    #allocation6 [shape = 's32[1]{0}', space=sflag, size = 0x4, scoped, tag = 'scoped memory for tpu_custom_call.1']
    #allocation7 [shape = 'u8[8192]{0}', space=vmem, size = 0x2000, scoped, tag = 'output window, operand 0, single buffered']
    %12 = vsyncpa [#allocation3], 0
    %13 = vsyncpa [#allocation6], 0
    %14 = vsyncpa [#allocation4], 0
    // Predicated region
    $region2: #{tpu_custom_call.1} parent=1 // pred_check
      _
    $region3: #{tpu_custom_call.1} parent=1 // pred_check_branch
      %16 = sbr.rel (0) target = $region5
    $region4: #{tpu_custom_call.1} parent=1 // pred_region
      %18 = vsyncadd [#allocation3], 0
      %s20 = sshll.u32 %s0, 4
      %s21 = int_to_ptr.hbm [resolvable:$true] %s20
      %s22 = sshll.u32 [#allocation2], 4
      %s23 = int_to_ptr.vmem [resolvable:$true] %s22
      %25 = dma.hbm_to_vmem [thread:$0]  %s21, 256, %s23, [#allocation3]
    $region5: #{tpu_custom_call.1} parent=1 // pred_fallthru
      _
    // Predicated region
    $region6: #{tpu_custom_call.1} parent=1 // pred_check
      _
    $region7: #{tpu_custom_call.1} parent=1 // pred_check_branch
      %27 = sbr.rel (0) target = $region9
    $region8: #{tpu_custom_call.1} parent=1 // pred_region
      _
    $region9: #{tpu_custom_call.1} parent=1 // pred_fallthru
      _
    // Predicated region
    $region10: #{tpu_custom_call.1} parent=1 // pred_check
      _
    $region11: #{tpu_custom_call.1} parent=1 // pred_check_branch
      %29 = sbr.rel (0) target = $region13
    $region12: #{tpu_custom_call.1} parent=1 // pred_region
      _
    $region13: #{tpu_custom_call.1} parent=1 // pred_fallthru
      _
    // Predicated region
    $region14: #{tpu_custom_call.1} parent=1 // pred_check
      _
    $region15: #{tpu_custom_call.1} parent=1 // pred_check_branch
      %31 = sbr.rel (0) target = $region17
    $region16: #{tpu_custom_call.1} parent=1 // pred_region
      _
    $region17: #{tpu_custom_call.1} parent=1 // pred_fallthru
      _
    // Predicated region
    $region18: #{tpu_custom_call.1} parent=1 // pred_check
      _
    $region19: #{tpu_custom_call.1} parent=1 // pred_check_branch
      %33 = sbr.rel (0) target = $region21
    $region20: #{tpu_custom_call.1} parent=1 // pred_region
      %35 = vsyncadd [#allocation6], 0
      %s37 = sshll.u32 %s4, 4
      %s38 = int_to_ptr.hbm [resolvable:$true] %s37
      %s39 = sshll.u32 [#allocation5], 4
      %s40 = int_to_ptr.vmem [resolvable:$true] %s39
      %42 = dma.hbm_to_vmem [thread:$0]  %s38, 128, %s40, [#allocation6]
    $region21: #{tpu_custom_call.1} parent=1 // pred_fallthru
      _
    // Predicated region
    $region22: #{tpu_custom_call.1} parent=1 // pred_check
      _
    $region23: #{tpu_custom_call.1} parent=1 // pred_check_branch
      %44 = sbr.rel (0) target = $region25
    $region24: #{tpu_custom_call.1} parent=1 // pred_region
      _
    $region25: #{tpu_custom_call.1} parent=1 // pred_fallthru
      _
    // Predicated region
    $region26: #{tpu_custom_call.1} parent=1 // pred_check
      _
    $region27: #{tpu_custom_call.1} parent=1 // pred_check_branch
      %46 = sbr.rel (0) target = $region29
    $region28: #{tpu_custom_call.1} parent=1 // pred_region
      _
    $region29: #{tpu_custom_call.1} parent=1 // pred_fallthru
      _
    // Predicated region
    $region30: #{tpu_custom_call.1} parent=1 // pred_check
      _
    $region31: #{tpu_custom_call.1} parent=1 // pred_check_branch
      %48 = sbr.rel (0) target = $region33
    $region32: #{tpu_custom_call.1} parent=1 // pred_region
      %50 = dma.done [#allocation3], 256
    $region33: #{tpu_custom_call.1} parent=1 // pred_fallthru
      _
    // Predicated region
    $region34: #{tpu_custom_call.1} parent=1 // pred_check
      _
    $region35: #{tpu_custom_call.1} parent=1 // pred_check_branch
      %52 = sbr.rel (0) target = $region37
    $region36: #{tpu_custom_call.1} parent=1 // pred_region
      %54 = dma.done [#allocation6], 128
    $region37: #{tpu_custom_call.1} parent=1 // pred_fallthru
      _
    %v55 = vlaneseq
    %v56 = vand.u32 %v55, 127
    %v57 = vadd.s32 %v56, 128
    %vm58 = vcmp.lt.s32.totalorder %v56, 0
    %v59 = vsub.s32 0, %v56
    %v60 = vsel %vm58, %v59, %v56
    %v61 = vshrl.u32 %v60, 4
    %v62 = vand.u32 %v60, 15
    %v63 = vsub.s32 0, %v62
    %v64 = vsel %vm58, %v63, %v62
    %vm65 = vcmp.lt.s32.totalorder %v57, 0
    %v66 = vsub.s32 0, %v57
    %v67 = vsel %vm65, %v66, %v57
    %v68 = vshrl.u32 %v67, 4
    %v69 = vand.u32 %v67, 15
    %v70 = vsub.s32 0, %v69
    %v71 = vsel %vm65, %v70, %v69
    %vm72 = vcmp.ne.s32.totalorder %v64, 0
    %vm73 = vcmp.ne.s32.totalorder %v71, 0
    %vm74 = vcmp.lt.s32.totalorder %v64, 0
    %vm75 = vcmp.lt.s32.totalorder %v71, 0
    %vm76 = vmand %vm74, %vm72
    %vm77 = vmand %vm75, %vm73
    %v78 = vadd.s32 %v64, 16
    %v79 = vadd.s32 %v71, 16
    %v80 = vsel %vm76, %v78, %v64
    %v81 = vsel %vm77, %v79, %v71
    %vm82 = vcmp.ge.s32.totalorder %v80, 1
    %vm83 = vcmp.ge.s32.totalorder %v81, 1
    %vm84 = vcmp.lt.s32.totalorder %v80, 15
    %vm85 = vcmp.lt.s32.totalorder %v81, 15
    %v86 = vld [vmem:[#allocation2] sm:$0xff]
    %v87 = vld [vmem:[#allocation2 + $0x8] sm:$0xff]
    %90 = vrot.lane.b32.xlu0 %v86, 17
    %v91 = vpop.permute.xlu0 %90
    %92 = vrot.lane.b32.xlu0 %v87, 17
    %v93 = vpop.permute.xlu0 %92
    %vm94 = vcmask 138240
    %v95 = vsel %vm94, %v91, %v93
    %v99 = vsel %vm94, 0.0, %v91
    %v100 = vsel %vm94, %v93, 0.0
    %v101 = vsel %vm82, %v99, 0.0
    %v102 = vsel %vm83, %v95, 0.0
    %105 = vrot.lane.b32.xlu0 %v99, 126
    %v106 = vpop.permute.xlu0 %105
    %107 = vrot.lane.b32.xlu0 %v95, 126
    %v108 = vpop.permute.xlu0 %107
    %109 = vrot.lane.b32.xlu0 %v100, 126
    %v110 = vpop.permute.xlu0 %109
    %vm111 = vcmask 1031168
    %v112 = vsel %vm111, %v106, %v108
    %v113 = vsel %vm111, %v108, %v110
    %v116 = vsel %vm84, %v112, 0.0
    %v117 = vsel %vm85, %v113, 0.0
    %118 = vrot.lane.b32.xlu0 %v99, 112
    %v119 = vpop.permute.xlu0 %118
    %120 = vrot.lane.b32.xlu0 %v95, 112
    %v121 = vpop.permute.xlu0 %120
    %122 = vrot.lane.b32.xlu0 %v100, 112
    %v123 = vpop.permute.xlu0 %122
    %vm124 = vcmask 916480
    %v125 = vsel %vm124, %v119, %v121
    %v126 = vsel %vm124, %v121, %v123
    %v129 = vsel %vm82, %v125, 0.0
    %v130 = vsel %vm83, %v126, 0.0
    %131 = vrot.lane.b32.xlu0 %v99, 110
    %v132 = vpop.permute.xlu0 %131
    %133 = vrot.lane.b32.xlu0 %v95, 110
    %v134 = vpop.permute.xlu0 %133
    %135 = vrot.lane.b32.xlu0 %v100, 110
    %v136 = vpop.permute.xlu0 %135
    %vm137 = vcmask 900096
    %v138 = vsel %vm137, %v132, %v134
    %v139 = vsel %vm137, %v134, %v136
    %v142 = vsel %vm84, %v138, 0.0
    %v143 = vsel %vm85, %v139, 0.0
    %144 = vrot.lane.b32.xlu0 %v99, 96
    %v145 = vpop.permute.xlu0 %144
    %146 = vrot.lane.b32.xlu0 %v95, 96
    %v147 = vpop.permute.xlu0 %146
    %148 = vrot.lane.b32.xlu0 %v100, 96
    %v149 = vpop.permute.xlu0 %148
    %vm150 = vcmask 785408
    %v151 = vsel %vm150, %v145, %v147
    %v152 = vsel %vm150, %v147, %v149
    %v155 = vsel %vm82, %v151, 0.0
    %v156 = vsel %vm83, %v152, 0.0
    %157 = vrot.lane.b32.xlu0 %v99, 94
    %v158 = vpop.permute.xlu0 %157
    %159 = vrot.lane.b32.xlu0 %v95, 94
    %v160 = vpop.permute.xlu0 %159
    %161 = vrot.lane.b32.xlu0 %v100, 94
    %v162 = vpop.permute.xlu0 %161
    %vm163 = vcmask 769024
    %v164 = vsel %vm163, %v158, %v160
    %v165 = vsel %vm163, %v160, %v162
    %v168 = vsel %vm84, %v164, 0.0
    %v169 = vsel %vm85, %v165, 0.0
    %170 = vrot.lane.b32.xlu0 %v99, 127
    %v171 = vpop.permute.xlu0 %170
    %172 = vrot.lane.b32.xlu0 %v95, 127
    %v173 = vpop.permute.xlu0 %172
    %174 = vrot.lane.b32.xlu0 %v100, 127
    %v175 = vpop.permute.xlu0 %174
    %vm176 = vcmask 1039360
    %v177 = vsel %vm176, %v171, %v173
    %v178 = vsel %vm176, %v173, %v175
    %181 = vrot.lane.b32.xlu0 %v99, 111
    %v182 = vpop.permute.xlu0 %181
    %183 = vrot.lane.b32.xlu0 %v95, 111
    %v184 = vpop.permute.xlu0 %183
    %185 = vrot.lane.b32.xlu0 %v100, 111
    %v186 = vpop.permute.xlu0 %185
    %vm187 = vcmask 908288
    %v188 = vsel %vm187, %v182, %v184
    %v189 = vsel %vm187, %v184, %v186
    %192 = vrot.lane.b32.xlu0 %v99, 95
    %v193 = vpop.permute.xlu0 %192
    %194 = vrot.lane.b32.xlu0 %v95, 95
    %v195 = vpop.permute.xlu0 %194
    %196 = vrot.lane.b32.xlu0 %v100, 95
    %v197 = vpop.permute.xlu0 %196
    %vm198 = vcmask 777216
    %v199 = vsel %vm198, %v193, %v195
    %v200 = vsel %vm198, %v195, %v197
    %v203 = vld [vmem:[%s1] sm:$0xff]
    %vm204 = vcmask 588800
    %v206 = vsel %vm204, %v203, 0
    %208 = vmatpush.msra.mxu0 0.0
    %209 = vmatpush.msra.mxu0 0.0
    %210 = vmatpush.msra.mxu0 0.0
    %211 = vmatpush.msra.mxu0 0.0
    %212 = vmatpush.msra.mxu0 0.0
    %213 = vmatpush.msra.mxu0 0.0
    %214 = vmatpush.msra.mxu0 0.0
    %215 = vmatpush.msra.mxu0 %v168
    %216 = vmatpush.msra.mxu0 %v199
    %217 = vmatpush.msra.mxu0 %v155
    %218 = vmatpush.msra.mxu0 %v142
    %219 = vmatpush.msra.mxu0 %v188
    %220 = vmatpush.msra.mxu0 %v129
    %221 = vmatpush.msra.mxu0 %v116
    %222 = vmatpush.msra.mxu0 %v177
    %223 = vmatpush.msra.mxu0 %v101
    %224 = vmatmul.f32.gmra.mxu0 %v206
    %v225 = vpop.f32.mrf.mxu0
    %v226 = vadd.f32 0.0, %v225
    %227 = vdwg.mxu0
    %228 = vmatpush.msra.mxu0 0.0
    %229 = vmatpush.msra.mxu0 0.0
    %230 = vmatpush.msra.mxu0 0.0
    %231 = vmatpush.msra.mxu0 0.0
    %232 = vmatpush.msra.mxu0 0.0
    %233 = vmatpush.msra.mxu0 0.0
    %234 = vmatpush.msra.mxu0 0.0
    %235 = vmatpush.msra.mxu0 %v169
    %236 = vmatpush.msra.mxu0 %v200
    %237 = vmatpush.msra.mxu0 %v156
    %238 = vmatpush.msra.mxu0 %v143
    %239 = vmatpush.msra.mxu0 %v189
    %240 = vmatpush.msra.mxu0 %v130
    %241 = vmatpush.msra.mxu0 %v117
    %242 = vmatpush.msra.mxu0 %v178
    %243 = vmatpush.msra.mxu0 %v102
    %244 = vmatmul.f32.gmra.mxu0 %v206
    %v245 = vpop.f32.mrf.mxu0
    %v246 = vadd.f32 0.0, %v245
    %247 = vdwg.mxu0
    %v248 = vadd.f32 %v226, %v246
    %249 = vadd.xlane.f32.xlu0 %v248
    %v250 = vpop.xlane.xlu0 %249
    %v251 = vmul.f32 %v226, %v226
    %v252 = vmul.f32 %v246, %v246
    %v253 = vadd.f32 %v251, %v252
    %254 = vadd.xlane.f32.xlu0 %v253
    %v255 = vpop.xlane.xlu0 %254
    %v257 = vrot.slane %v250, 4
    %v259 = vadd.f32 %v250, %v257
    %v261 = vrot.slane %v255, 4
    %v263 = vadd.f32 %v255, %v261
    %v264 = vmul.f32 %v259, 0.001953125
    %v265 = vmul.f32 %v263, 0.001953125
    %v266 = vmul.f32 %v264, %v264
    %v267 = vsub.f32 %v265, %v266
    %v268 = vld [vmem:[%s2] sm:$0xf]
    %v269 = vadd.f32 %v267, 1e-05
    %v270 = vrsqrt.pop %v269
    %v271 = vmul.f32 %v270, %v269
    %v272 = vmul.f32 %v271, %v270
    %v273 = vmul.f32 0.5, %v272
    %v274 = vsub.f32 1.5, %v273
    %v275 = vmul.f32 %v270, %v274
    %vm276 = vweird.f32 %v269
    %vm277 = vweird.f32 %v270
    %vm278 = vmor %vm276, %vm277
    %v279 = vsel %vm278, %v270, %v275
    %v280 = vmul.f32 %v268, %v279
    %v281 = vld [vmem:[%s3] sm:$0xf]
    %v282 = vmul.f32 %v264, %v280
    %v283 = vsub.f32 %v281, %v282
    %v285 = vrot.slane %v280, 4
    %vm287 = vcmask 1043456
    %v288 = vsel %vm287, %v280, %v285
    %v290 = vrot.slane %v283, 4
    %v292 = vsel %vm287, %v283, %v290
    %294 = vset.pattern.permute.xlu0 0
    %295 = vperm.xlu0 %294, %v288
    %v296 = vpop.permute.xlu0 %295
    %v298 = vmul.f32 %v226, %v296
    %v299 = vmul.f32 %v246, %v296
    %301 = vset.pattern.permute.xlu0 0
    %302 = vperm.xlu0 %301, %v292
    %v303 = vpop.permute.xlu0 %302
    %v305 = vadd.f32 %v298, %v303
    %v306 = vadd.f32 %v299, %v303
    %v307 = vmax.f32 %v305, 0.0
    %v308 = vmax.f32 %v306, 0.0
    %311 = vrot.lane.b32.xlu0 %v307, 17
    %v312 = vpop.permute.xlu0 %311
    %313 = vrot.lane.b32.xlu0 %v308, 17
    %v314 = vpop.permute.xlu0 %313
    %v315 = vsel %vm94, %v312, %v314
    %v319 = vsel %vm94, 0.0, %v312
    %v320 = vsel %vm94, %v314, 0.0
    %v321 = vsel %vm82, %v319, 0.0
    %v322 = vsel %vm83, %v315, 0.0
    %325 = vrot.lane.b32.xlu0 %v319, 126
    %v326 = vpop.permute.xlu0 %325
    %327 = vrot.lane.b32.xlu0 %v315, 126
    %v328 = vpop.permute.xlu0 %327
    %329 = vrot.lane.b32.xlu0 %v320, 126
    %v330 = vpop.permute.xlu0 %329
    %v331 = vsel %vm111, %v326, %v328
    %v332 = vsel %vm111, %v328, %v330
    %v335 = vsel %vm84, %v331, 0.0
    %v336 = vsel %vm85, %v332, 0.0
    %337 = vrot.lane.b32.xlu0 %v319, 112
    %v338 = vpop.permute.xlu0 %337
    %339 = vrot.lane.b32.xlu0 %v315, 112
    %v340 = vpop.permute.xlu0 %339
    %341 = vrot.lane.b32.xlu0 %v320, 112
    %v342 = vpop.permute.xlu0 %341
    %v343 = vsel %vm124, %v338, %v340
    %v344 = vsel %vm124, %v340, %v342
    %v347 = vsel %vm82, %v343, 0.0
    %v348 = vsel %vm83, %v344, 0.0
    %349 = vrot.lane.b32.xlu0 %v319, 110
    %v350 = vpop.permute.xlu0 %349
    %351 = vrot.lane.b32.xlu0 %v315, 110
    %v352 = vpop.permute.xlu0 %351
    %353 = vrot.lane.b32.xlu0 %v320, 110
    %v354 = vpop.permute.xlu0 %353
    %v355 = vsel %vm137, %v350, %v352
    %v356 = vsel %vm137, %v352, %v354
    %v359 = vsel %vm84, %v355, 0.0
    %v360 = vsel %vm85, %v356, 0.0
    %361 = vrot.lane.b32.xlu0 %v319, 96
    %v362 = vpop.permute.xlu0 %361
    %363 = vrot.lane.b32.xlu0 %v315, 96
    %v364 = vpop.permute.xlu0 %363
    %365 = vrot.lane.b32.xlu0 %v320, 96
    %v366 = vpop.permute.xlu0 %365
    %v367 = vsel %vm150, %v362, %v364
    %v368 = vsel %vm150, %v364, %v366
    %v371 = vsel %vm82, %v367, 0.0
    %v372 = vsel %vm83, %v368, 0.0
    %373 = vrot.lane.b32.xlu0 %v319, 94
    %v374 = vpop.permute.xlu0 %373
    %375 = vrot.lane.b32.xlu0 %v315, 94
    %v376 = vpop.permute.xlu0 %375
    %377 = vrot.lane.b32.xlu0 %v320, 94
    %v378 = vpop.permute.xlu0 %377
    %v379 = vsel %vm163, %v374, %v376
    %v380 = vsel %vm163, %v376, %v378
    %v383 = vsel %vm84, %v379, 0.0
    %v384 = vsel %vm85, %v380, 0.0
    %385 = vrot.lane.b32.xlu0 %v319, 127
    %v386 = vpop.permute.xlu0 %385
    %387 = vrot.lane.b32.xlu0 %v315, 127
    %v388 = vpop.permute.xlu0 %387
    %389 = vrot.lane.b32.xlu0 %v320, 127
    %v390 = vpop.permute.xlu0 %389
    %v391 = vsel %vm176, %v386, %v388
    %v392 = vsel %vm176, %v388, %v390
    %395 = vrot.lane.b32.xlu0 %v319, 111
    %v396 = vpop.permute.xlu0 %395
    %397 = vrot.lane.b32.xlu0 %v315, 111
    %v398 = vpop.permute.xlu0 %397
    %399 = vrot.lane.b32.xlu0 %v320, 111
    %v400 = vpop.permute.xlu0 %399
    %v401 = vsel %vm187, %v396, %v398
    %v402 = vsel %vm187, %v398, %v400
    %405 = vrot.lane.b32.xlu0 %v319, 95
    %v406 = vpop.permute.xlu0 %405
    %407 = vrot.lane.b32.xlu0 %v315, 95
    %v408 = vpop.permute.xlu0 %407
    %409 = vrot.lane.b32.xlu0 %v320, 95
    %v410 = vpop.permute.xlu0 %409
    %v411 = vsel %vm198, %v406, %v408
    %v412 = vsel %vm198, %v408, %v410
    %v415 = vld [vmem:[#allocation5] sm:$0xff]
    %v417 = vsel %vm204, %v415, 0
    %419 = vmatpush.msra.mxu0 0.0
    %420 = vmatpush.msra.mxu0 0.0
    %421 = vmatpush.msra.mxu0 0.0
    %422 = vmatpush.msra.mxu0 0.0
    %423 = vmatpush.msra.mxu0 0.0
    %424 = vmatpush.msra.mxu0 0.0
    %425 = vmatpush.msra.mxu0 0.0
    %426 = vmatpush.msra.mxu0 %v383
    %427 = vmatpush.msra.mxu0 %v411
    %428 = vmatpush.msra.mxu0 %v371
    %429 = vmatpush.msra.mxu0 %v359
    %430 = vmatpush.msra.mxu0 %v401
    %431 = vmatpush.msra.mxu0 %v347
    %432 = vmatpush.msra.mxu0 %v335
    %433 = vmatpush.msra.mxu0 %v391
    %434 = vmatpush.msra.mxu0 %v321
    %435 = vmatmul.f32.gmra.mxu0 %v417
    %v436 = vpop.f32.mrf.mxu0
    %v437 = vadd.f32 0.0, %v436
    %438 = vdwg.mxu0
    %439 = vmatpush.msra.mxu0 0.0
    %440 = vmatpush.msra.mxu0 0.0
    %441 = vmatpush.msra.mxu0 0.0
    %442 = vmatpush.msra.mxu0 0.0
    %443 = vmatpush.msra.mxu0 0.0
    %444 = vmatpush.msra.mxu0 0.0
    %445 = vmatpush.msra.mxu0 0.0
    %446 = vmatpush.msra.mxu0 %v384
    %447 = vmatpush.msra.mxu0 %v412
    %448 = vmatpush.msra.mxu0 %v372
    %449 = vmatpush.msra.mxu0 %v360
    %450 = vmatpush.msra.mxu0 %v402
    %451 = vmatpush.msra.mxu0 %v348
    %452 = vmatpush.msra.mxu0 %v336
    %453 = vmatpush.msra.mxu0 %v392
    %454 = vmatpush.msra.mxu0 %v322
    %455 = vmatmul.f32.gmra.mxu0 %v417
    %v456 = vpop.f32.mrf.mxu0
    %v457 = vadd.f32 0.0, %v456
    %458 = vdwg.mxu0
    %v459 = vadd.f32 %v437, %v457
    %460 = vadd.xlane.f32.xlu0 %v459
    %v461 = vpop.xlane.xlu0 %460
    %v462 = vmul.f32 %v437, %v437
    %v463 = vmul.f32 %v457, %v457
    %v464 = vadd.f32 %v462, %v463
    %465 = vadd.xlane.f32.xlu0 %v464
    %v466 = vpop.xlane.xlu0 %465
    %v468 = vrot.slane %v461, 4
    %v470 = vadd.f32 %v461, %v468
    %v472 = vrot.slane %v466, 4
    %v474 = vadd.f32 %v466, %v472
    %v475 = vmul.f32 %v470, 0.001953125
    %v476 = vmul.f32 %v474, 0.001953125
    %v477 = vmul.f32 %v475, %v475
    %v478 = vsub.f32 %v476, %v477
    %v479 = vld [vmem:[%s5] sm:$0xf]
    %v480 = vadd.f32 %v478, 1e-05
    %v481 = vrsqrt.pop %v480
    %v482 = vmul.f32 %v481, %v480
    %v483 = vmul.f32 %v482, %v481
    %v484 = vmul.f32 0.5, %v483
    %v485 = vsub.f32 1.5, %v484
    %v486 = vmul.f32 %v481, %v485
    %vm487 = vweird.f32 %v480
    %vm488 = vweird.f32 %v481
    %vm489 = vmor %vm487, %vm488
    %v490 = vsel %vm489, %v481, %v486
    %v491 = vmul.f32 %v479, %v490
    %v492 = vld [vmem:[%s6] sm:$0xf]
    %v493 = vmul.f32 %v475, %v491
    %v494 = vsub.f32 %v492, %v493
    %v496 = vrot.slane %v491, 4
    %v498 = vsel %vm287, %v491, %v496
    %v500 = vrot.slane %v494, 4
    %v502 = vsel %vm287, %v494, %v500
    %504 = vset.pattern.permute.xlu0 0
    %505 = vperm.xlu0 %504, %v498
    %v506 = vpop.permute.xlu0 %505
    %v508 = vmul.f32 %v437, %v506
    %v509 = vmul.f32 %v457, %v506
    %511 = vset.pattern.permute.xlu0 0
    %512 = vperm.xlu0 %511, %v502
    %v513 = vpop.permute.xlu0 %512
    %v515 = vadd.f32 %v508, %v513
    %v516 = vadd.f32 %v509, %v513
    %v517 = vadd.f32 %v515, %v86
    %v518 = vadd.f32 %v516, %v87
    %519 = vst [vmem:[#allocation7] sm:$0xff] %v517
    %520 = vst [vmem:[#allocation7 + $0x8] sm:$0xff] %v518
    // Predicated region
    $region38: #{tpu_custom_call.1} parent=1 // pred_check
      _
    $region39: #{tpu_custom_call.1} parent=1 // pred_check_branch
      %522 = sbr.rel (0) target = $region41
    $region40: #{tpu_custom_call.1} parent=1 // pred_region
      %524 = vsyncadd [#allocation4], 0
      %s526 = sshll.u32 [#allocation7], 4
      %s527 = int_to_ptr.vmem [resolvable:$true] %s526
      %s528 = sshll.u32 %s7, 4
      %s529 = int_to_ptr.hbm [resolvable:$true] %s528
      %531 = dma.vmem_to_hbm [thread:$0]  %s527, 256, %s529, [#allocation4]
    $region41: #{tpu_custom_call.1} parent=1 // pred_fallthru
      _
    // Predicated region
    $region42: #{tpu_custom_call.1} parent=1 // pred_check
      _
    $region43: #{tpu_custom_call.1} parent=1 // pred_check_branch
      %533 = sbr.rel (0) target = $region45
    $region44: #{tpu_custom_call.1} parent=1 // pred_region
      %535 = dma.done [#allocation4], 256
    $region45: #{tpu_custom_call.1} parent=1 // pred_fallthru
      _
    %536 = vsyncpa [#allocation3], 1
    %537 = vsyncpa [#allocation6], 1
    %538 = vsyncpa [#allocation4], 1

</llo_original>
